<compile_context>
chip_gen: v6e
topology: v6e:2x2x1
jax: 0.10.0
libtpu: 0.0.40
codegen_flags: <defaults>
</compile_context>

<pallas_src>
import functools

import jax
import jax.numpy as jnp
from jax.experimental import pallas as pl
from jax.experimental.pallas import tpu as pltpu


def _round_up(x, m):
    return ((x + m - 1) // m) * m


_VMEM_BUDGET = 24 << 20        # bytes we budget for double-buffered in+out blocks
_VMEM_LIMIT = 32 << 20         # scoped VMEM limit (safe on v5e/v6e/v7x)
_TARGET_OUT_BLOCK = 8 << 20    # amortize ~0.35us/step pipeline overhead
_BYPASS_OUT_BYTES = 2 << 20    # below this, let XLA fuse the broadcast-FMA


def _pick_block_rows(total_rows, out_row_bytes, in_row_bytes, const_bytes,
                     override=None):
    """Rows per grid block: multiple of 8, sized for VMEM budget + overhead amortization."""
    if override is not None:
        tb = int(override)
    else:
        per_row = 2 * (out_row_bytes + in_row_bytes)          # double-buffered in + out
        budget = max(_VMEM_BUDGET - const_bytes, per_row * 8)
        tb = budget // per_row
        tb = min(tb, max(_TARGET_OUT_BLOCK // max(out_row_bytes, 1), 8))
    tb = min(tb, _round_up(total_rows, 8))
    return max(8, (tb // 8) * 8)


# ----------------------------- kernels --------------------------------------

def _pi_tn_direct_kernel(t_ref, wb_ref, o_ref):
    # t_ref : (TB, 1)      -- per-row scalar "time"
    # wb_ref: (2, R)  f32  -- row 0 = W^T, row 1 = bias (fused single operand)
    # o_ref : (TB, R)      -- exact-size output block
    t = t_ref[...].astype(jnp.float32)          # (TB, 1)
    w = wb_ref[0:1, :]                          # (1, R)
    b = wb_ref[1:2, :]                          # (1, R)
    # Pure VPU broadcast mul-add (K=1 matmul would waste the MXU); cast at the store.
    o_ref[...] = (t * w + b).astype(o_ref.dtype)


def _pi_tn_packed_kernel(t_ref, mb_ref, o_ref):
    # t_ref : (TB, P)          -- P batch rows packed per 128-lane output row
    # mb_ref: (P+1, P*R) f32   -- rows 0..P-1 = kron(I_P, W^T) block-diag, row P = tile(bias, P)
    # o_ref : (TB, P*R)        -- lane-dense (P*R == 128)
    p = mb_ref.shape[0] - 1
    t = t_ref[...].astype(jnp.float32)          # (TB, P)
    m = mb_ref[0:p, :]                          # (P, 128)
    b = mb_ref[p:p + 1, :]                      # (1, 128)
    # Block-diagonal MXU matmul does the lane fan-out with no cross-lane shuffles;
    # fully hidden under the HBM writeback.
    acc = jnp.dot(t, m, preferred_element_type=jnp.float32) + b
    o_ref[...] = acc.astype(o_ref.dtype)


# ----------------------------- wrapper ---------------------------------------

def pi_tn_forward(t, weight, bias, *, out_dtype=None, max_block_rows=None,
                  force_pallas=False):
    """Equivalent of nn.Linear(1, regime): out = t @ W.T + bias.

    t: (B, 1), weight: (R, 1), bias: (R,)  ->  (B, R) in `out_dtype` (default t.dtype).
    """
    B = int(t.shape[0])
    R = int(weight.shape[0])
    out_dtype = jnp.dtype(t.dtype if out_dtype is None else out_dtype)
    out_bytes = out_dtype.itemsize
    t_bytes = jnp.dtype(t.dtype).itemsize

    # Tiny outputs: pallas_call launch overhead dominates; XLA fuses this for free.
    if not force_pallas and B * R * out_bytes < _BYPASS_OUT_BYTES:
        out = (t.astype(jnp.float32) @ weight.T.astype(jnp.float32)
               + bias.astype(jnp.float32))
        return out.astype(out_dtype)

    cparams = pltpu.CompilerParams(
        # Batch blocks are fully independent. ("parallel" is near-free; switch to
        # pltpu.CORE_PARALLEL if xprof shows a v7x TensorCore idle.)
        dimension_semantics=("parallel",),
        vmem_limit_bytes=_VMEM_LIMIT)

    p = 128 // R if (0 < R < 128 and 128 % R == 0) else 1
    use_packed = p > 1 and (B % p == 0)

    if use_packed:
        # ---- lane-packed path: zero padded lanes, zero extra HBM passes --------
        bp = B // p
        w_row = weight[:, 0].astype(jnp.float32)                       # (R,)
        m = (jnp.eye(p, dtype=jnp.float32)[:, :, None]
             * w_row[None, None, :]).reshape(p, p * R)                 # block-diag
        b_tiled = jnp.tile(bias.astype(jnp.float32), (p,)).reshape(1, p * R)
        mb = jnp.concatenate([m, b_tiled], axis=0)                     # (p+1, 128)

        t_packed = t.reshape(bp, p)                                    # free bitcast

        out_row_bytes = 128 * out_bytes                 # lane-dense output row
        in_row_bytes = 128 * t_bytes                    # (TB,p) lane-pads to 128 lanes in VMEM
        tb = _pick_block_rows(bp, out_row_bytes, in_row_bytes,
                              mb.size * 4, max_block_rows)

        out_packed = pl.pallas_call(
            _pi_tn_packed_kernel,
            out_shape=jax.ShapeDtypeStruct((bp, p * R), out_dtype),
            grid_spec=pltpu.PrefetchScalarGridSpec(
                num_scalar_prefetch=0,
                grid=(pl.cdiv(bp, tb),),                # boundary block is clipped
                in_specs=[
                    pl.BlockSpec((tb, p), lambda i: (i, 0)),           # packed t
                    pl.BlockSpec((p + 1, p * R), lambda i: (0, 0)),    # fused W/bias
                ],
                out_specs=pl.BlockSpec((tb, p * R), lambda i: (i, 0)),
            ),
            compiler_params=cparams,
        )(t_packed, mb)

        # (bp, p*R) row-major is bit-identical to (B, R) row-major -> free reshape.
        return out_packed.reshape(B, R)

    # ---- direct path: exact (B, R) output, no padding, no slicing --------------
    # (If R % 128 != 0 the output stores are masked, but we still avoid any extra
    #  HBM pass; R a multiple of 128 is naturally lane-dense.)
    wb = jnp.stack([weight[:, 0].astype(jnp.float32),
                    bias.astype(jnp.float32)], axis=0)                 # (2, R)

    out_row_bytes = _round_up(R, 128) * out_bytes       # physical VMEM lanes per row
    in_row_bytes = 128 * t_bytes                        # (TB,1) lane-pads to 128 lanes
    tb = _pick_block_rows(B, out_row_bytes, in_row_bytes,
                          wb.size * 4, max_block_rows)

    out = pl.pallas_call(
        _pi_tn_direct_kernel,
        out_shape=jax.ShapeDtypeStruct((B, R), out_dtype),
        grid_spec=pltpu.PrefetchScalarGridSpec(
            num_scalar_prefetch=0,
            grid=(pl.cdiv(B, tb),),                     # boundary block is clipped
            in_specs=[
                pl.BlockSpec((tb, 1), lambda i: (i, 0)),               # t tile
                pl.BlockSpec((2, R), lambda i: (0, 0)),                # fused W/bias
            ],
            out_specs=pl.BlockSpec((tb, R), lambda i: (i, 0)),
        ),
        compiler_params=cparams,
    )(t, wb)
    return out


if __name__ == "__main__":
    key = jax.random.PRNGKey(0)
    k_t, k_w, k_b, k_t2 = jax.random.split(key, 4)

    regime = 32
    batch = 8

    # Parameter init mimicking nn.Linear(1, regime): uniform(-1, 1) since in_features=1.
    weight = jax.random.uniform(k_w, (regime, 1), jnp.float32, -1.0, 1.0)
    bias = jax.random.uniform(k_b, (regime,), jnp.float32, -1.0, 1.0)
    t = jax.random.normal(k_t, (batch, 1), jnp.float32)

    # Force the Pallas path at this tiny size so the kernel is exercised;
    # production callers at this size get the fused XLA path for free.
    out = jax.block_until_ready(pi_tn_forward(t, weight, bias, force_pallas=True))
    ref = t @ weight.T + bias
    assert out.shape == (batch, regime) and out.dtype == jnp.float32
    assert jnp.allclose(out, ref, atol=1e-6, rtol=1e-6)

    # Ragged, multi-block batch through the lane-packed path (p=4, Bp=50, TB=16 ->
    # clipped boundary block) -- exercises cdiv grid + packing + free reshape.
    t2 = jax.random.normal(k_t2, (200, 1), jnp.float32)
    out2 = jax.block_until_ready(
        pi_tn_forward(t2, weight, bias, force_pallas=True, max_block_rows=16))
    ref2 = t2 @ weight.T + bias
    assert out2.shape == (200, regime)
    assert jnp.allclose(out2, ref2, atol=1e-6, rtol=1e-6)

    # Regime that doesn't divide 128 -> direct (unpacked) path, ragged batch.
    regime3 = 48
    w3 = jax.random.uniform(k_w, (regime3, 1), jnp.float32, -1.0, 1.0)
    b3 = jax.random.uniform(k_b, (regime3,), jnp.float32, -1.0, 1.0)
    out3 = jax.block_until_ready(
        pi_tn_forward(t2, w3, b3, force_pallas=True, max_block_rows=64))
    ref3 = t2 @ w3.T + b3
    assert out3.shape == (200, regime3)
    assert jnp.allclose(out3, ref3, atol=1e-6, rtol=1e-6)

    # bf16 writeback path (halves HBM write traffic), under jit.
    fwd_bf16 = jax.jit(functools.partial(pi_tn_forward, out_dtype=jnp.bfloat16,
                                         force_pallas=True))
    out4 = jax.block_until_ready(fwd_bf16(t2, weight, bias))
    assert out4.shape == (200, regime) and out4.dtype == jnp.bfloat16
    assert jnp.allclose(out4.astype(jnp.float32), ref2, atol=3e-2, rtol=3e-2)

    print("KERNEL_OK")
</pallas_src>

<mosaic_0001>
module attributes {stable_mosaic.version = 11 : i64} {
  func.func @_pi_tn_packed_kernel(%arg0: i32, %arg1: memref<8x4xf32, #tpu.memory_space<vmem>>, %arg2: memref<5x128xf32, #tpu.memory_space<vmem>>, %arg3: memref<8x128xf32, #tpu.memory_space<vmem>>) attributes {dimension_semantics = [#tpu.dimension_semantics<parallel>], iteration_bounds = array<i64: 1>, scalar_prefetch = 0 : i64, scratch_operands = 0 : i64, tpu.core_type = #tpu.core_type<tc>, window_params = [{transform_indices = @transform_0, window_bounds = array<i64: 8, 4>}, {pipeline_mode = #tpu.pipeline_mode<synchronous>, transform_indices = @transform_1, window_bounds = array<i64: 5, 128>}, {transform_indices = @transform_2, window_bounds = array<i64: 8, 128>}]} {
    %c0 = arith.constant 0 : index
    %c0_0 = arith.constant 0 : index
    %0 = vector.load %arg1[%c0, %c0_0] : memref<8x4xf32, #tpu.memory_space<vmem>>, vector<8x4xf32>
    %c0_1 = arith.constant 0 : index
    %c0_2 = arith.constant 0 : index
    %1 = vector.load %arg2[%c0_1, %c0_2] : memref<5x128xf32, #tpu.memory_space<vmem>>, vector<4x128xf32>
    %c4 = arith.constant 4 : index
    %c0_3 = arith.constant 0 : index
    %2 = vector.load %arg2[%c4, %c0_3] : memref<5x128xf32, #tpu.memory_space<vmem>>, vector<1x128xf32>
    %cst = arith.constant dense<0.000000e+00> : vector<8x128xf32>
    %3 = tpu.matmul %0, %1, %cst {dimension_numbers = #tpu.dot_dimension_numbers<[1], [0], [0], [1], [0, 0, 1, 1], [], []>} : vector<8x4xf32>, vector<4x128xf32>, vector<8x128xf32> -> vector<8x128xf32>
    %4 = vector.broadcast %2 : vector<1x128xf32> to vector<8x128xf32>
    %5 = arith.addf %3, %4 : vector<8x128xf32>
    %c0_4 = arith.constant 0 : index
    %c0_5 = arith.constant 0 : index
    %6 = vector.load %arg3[%c0_4, %c0_5] : memref<8x128xf32, #tpu.memory_space<vmem>>, vector<8x128xf32>
    tpu.vector_store %arg3[%c0_4, %c0_5], %5 {strides = array<i32>} : memref<8x128xf32, #tpu.memory_space<vmem>>, vector<8x128xf32>,
    return
  }
  func.func @transform_0(%arg0: i32) -> (i32, i32) {
    %c0_i32 = arith.constant 0 : i32
    %c0_i32_0 = arith.constant 0 : i32
    return %arg0, %c0_i32 : i32, i32
  }
  func.func @transform_1(%arg0: i32) -> (i32, i32) {
    %c0_i32 = arith.constant 0 : i32
    %c0_i32_0 = arith.constant 0 : i32
    %c0_i32_1 = arith.constant 0 : i32
    return %c0_i32, %c0_i32_0 : i32, i32
  }
  func.func @transform_2(%arg0: i32) -> (i32, i32) {
    %c0_i32 = arith.constant 0 : i32
    %c0_i32_0 = arith.constant 0 : i32
    return %arg0, %c0_i32 : i32, i32
  }
}

</mosaic_0001>

<llo_original>
// kernel: tpu_custom_call.1
$region0: #{tpu_custom_call.1}
  #allocation0 [shape = 'u32[]', space=smem, size = 0x4, offset = 0x4, fixed_abs, tag = 'smem constant byte address 0x4 - core index']
  #allocation1 [shape = 'u32[144,128]{1,0:T(1,128)}', space=vmem, size = 0x12000, scoped, tag = 'internal scratch']
  %s0 = inlined_call_operand.hbm [shape: f32[2,4], index: 0, kind: input, shape index: {}]
  %s1 = inlined_call_operand.hbm [shape: f32[5,128], index: 1, kind: input, shape index: {}]
  %s2 = inlined_call_operand.hbm [shape: f32[2,128], index: 2, kind: output, shape index: {}]
  %s3 = sld [smem:[#allocation0]]
  $region26: #{tpu_custom_call.1} parent=0
    _
  %s5 = ssub.s32 1, %s3
  %s6 = scalar_select 0, %s5, %s3
  $region1: #{tpu_custom_call.1} parent=0
    #allocation2 [shape = 'u8[4096]{0}', space=vmem, size = 0x1000, scoped, tag = 'input window, operand 0, single buffered']
    #allocation3 [shape = 's32[1]{0}', space=sflag, size = 0x4, scoped, tag = 'scoped memory for tpu_custom_call.1']
    #allocation4 [shape = 's32[1]{0}', space=sflag, size = 0x4, scoped, tag = 'scoped memory for tpu_custom_call.1']
    #allocation5 [shape = 'u8[4096]{0}', space=vmem, size = 0x1000, scoped, tag = 'input window, operand 1, single buffered']
    #allocation6 [shape = 's32[1]{0}', space=sflag, size = 0x4, scoped, tag = 'scoped memory for tpu_custom_call.1']
    #allocation7 [shape = 'u8[4096]{0}', space=vmem, size = 0x1000, scoped, tag = 'output window, operand 0, single buffered']
    %7 = vsyncpa [#allocation3], 0
    %8 = vsyncpa [#allocation6], 0
    %9 = vsyncpa [#allocation4], 0
    // Predicated region
    $region2: #{tpu_custom_call.1} parent=1 // pred_check
      _
    $region3: #{tpu_custom_call.1} parent=1 // pred_check_branch
      %11 = sbr.rel (0) target = $region5
    $region4: #{tpu_custom_call.1} parent=1 // pred_region
      %s13 = ssub.s32 128, 32
      %14 = vsyncadd [#allocation3], %s13
      %s15 = sshll.u32 [#allocation2], 4
      %s16 = int_to_ptr.vmem [resolvable:$true] %s15
      %21 = dma.hbm_to_vmem [thread:$0]  %s0, 32, %s16, [#allocation3], 32, 32, 2
    $region5: #{tpu_custom_call.1} parent=1 // pred_fallthru
      _
    // Predicated region
    $region6: #{tpu_custom_call.1} parent=1 // pred_check
      _
    $region7: #{tpu_custom_call.1} parent=1 // pred_check_branch
      %23 = sbr.rel (0) target = $region9
    $region8: #{tpu_custom_call.1} parent=1 // pred_region
      %s25 = ssub.s32 128, 128
      %26 = vsyncadd [#allocation6], %s25
      %s28 = sshll.u32 [#allocation5], 4
      %s29 = int_to_ptr.vmem [resolvable:$true] %s28
      %31 = dma.hbm_to_vmem [thread:$0]  %s1, 128, %s29, [#allocation6]
    $region9: #{tpu_custom_call.1} parent=1 // pred_fallthru
      _
    // Predicated region
    $region10: #{tpu_custom_call.1} parent=1 // pred_check
      _
    $region11: #{tpu_custom_call.1} parent=1 // pred_check_branch
      %33 = sbr.rel (0) target = $region13
    $region12: #{tpu_custom_call.1} parent=1 // pred_region
      %34 = dma.done [#allocation3], 128
    $region13: #{tpu_custom_call.1} parent=1 // pred_fallthru
      _
    // Predicated region
    $region14: #{tpu_custom_call.1} parent=1 // pred_check
      _
    $region15: #{tpu_custom_call.1} parent=1 // pred_check_branch
      %36 = sbr.rel (0) target = $region17
    $region16: #{tpu_custom_call.1} parent=1 // pred_region
      %37 = dma.done [#allocation6], 128
    $region17: #{tpu_custom_call.1} parent=1 // pred_fallthru
      _
    %v38 = vld [vmem:[#allocation2] sm:$0xff]
    %v39 = vld [vmem:[#allocation5] sm:$0xf]
    %v40 = vld [vmem:[#allocation5 + $0x4] sm:$0x1]
    %v41 = vlaneseq
    %v42 = vshrl.u32 %v41, 7
    %v43 = vsub.s32 0, %v42
    %v44 = vrot.slane %v40, %v43
    %vm45 = vcmask 31744
    %v47 = vsel %vm45, %v38, 0
    %vm49 = vcmask 1043456
    %v51 = vsel %vm49, %v39, 0
    %53 = vmatprep.subr.mxu0 0.0
    %54 = vmatpush1.msra.mxu0 0.0
    %55 = vmatprep.subr.mxu0 0.0
    %56 = vmatpush1.msra.mxu0 0.0
    %57 = vmatprep.subr.mxu0 0.0
    %58 = vmatpush1.msra.mxu0 0.0
    %59 = vmatprep.subr.mxu0 0.0
    %60 = vmatpush1.msra.mxu0 0.0
    %61 = vmatprep.subr.mxu0 0.0
    %62 = vmatpush1.msra.mxu0 0.0
    %63 = vmatprep.subr.mxu0 0.0
    %64 = vmatpush1.msra.mxu0 0.0
    %65 = vmatprep.subr.mxu0 0.0
    %66 = vmatpush1.msra.mxu0 0.0
    %67 = vmatprep.subr.mxu0 0.0
    %68 = vmatpush1.msra.mxu0 0.0
    %69 = vmatprep.subr.mxu0 0.0
    %70 = vmatpush1.msra.mxu0 0.0
    %71 = vmatprep.subr.mxu0 0.0
    %72 = vmatpush1.msra.mxu0 0.0
    %73 = vmatprep.subr.mxu0 0.0
    %74 = vmatpush1.msra.mxu0 0.0
    %75 = vmatprep.subr.mxu0 0.0
    %76 = vmatpush1.msra.mxu0 0.0
    %77 = vmatprep.subr.mxu0 0.0
    %78 = vmatpush1.msra.mxu0 0.0
    %79 = vmatprep.subr.mxu0 0.0
    %80 = vmatpush1.msra.mxu0 0.0
    %81 = vmatprep.subr.mxu0 0.0
    %82 = vmatpush1.msra.mxu0 0.0
    %83 = vmatprep.subr.mxu0 0.0
    %84 = vmatpush1.msra.mxu0 %v51
    %85 = vmatprep.subr.mxu0 0.0
    %86 = vmatpush2.msra.mxu0 0.0
    %87 = vmatprep.subr.mxu0 0.0
    %88 = vmatpush2.msra.mxu0 0.0
    %89 = vmatprep.subr.mxu0 0.0
    %90 = vmatpush2.msra.mxu0 0.0
    %91 = vmatprep.subr.mxu0 0.0
    %92 = vmatpush2.msra.mxu0 0.0
    %93 = vmatprep.subr.mxu0 0.0
    %94 = vmatpush2.msra.mxu0 0.0
    %95 = vmatprep.subr.mxu0 0.0
    %96 = vmatpush2.msra.mxu0 0.0
    %97 = vmatprep.subr.mxu0 0.0
    %98 = vmatpush2.msra.mxu0 0.0
    %99 = vmatprep.subr.mxu0 0.0
    %100 = vmatpush2.msra.mxu0 0.0
    %101 = vmatprep.subr.mxu0 0.0
    %102 = vmatpush2.msra.mxu0 0.0
    %103 = vmatprep.subr.mxu0 0.0
    %104 = vmatpush2.msra.mxu0 0.0
    %105 = vmatprep.subr.mxu0 0.0
    %106 = vmatpush2.msra.mxu0 0.0
    %107 = vmatprep.subr.mxu0 0.0
    %108 = vmatpush2.msra.mxu0 0.0
    %109 = vmatprep.subr.mxu0 0.0
    %110 = vmatpush2.msra.mxu0 0.0
    %111 = vmatprep.subr.mxu0 0.0
    %112 = vmatpush2.msra.mxu0 0.0
    %113 = vmatprep.subr.mxu0 0.0
    %114 = vmatpush2.msra.mxu0 0.0
    %115 = vmatprep.subr.mxu0 0.0
    %116 = vmatpush2.msra.mxu0 0.0
    %117 = vmatprep.mubr.f32.mxu0 0.0
    %118 = vmatmul.mubr.f32.gmra.mxu0 %v47
    %v119 = vpop.f32.mrf.mxu0
    %v120 = vadd.f32 %v44, %v119
    %v121 = vpop.f32.mrf.mxu0
    %122 = vdwg.mxu0
    %123 = vst [vmem:[#allocation7] sm:$0xff] %v120
    // Predicated region
    $region18: #{tpu_custom_call.1} parent=1 // pred_check
      _
    $region19: #{tpu_custom_call.1} parent=1 // pred_check_branch
      %125 = sbr.rel (0) target = $region21
    $region20: #{tpu_custom_call.1} parent=1 // pred_region
      %s127 = ssub.s32 128, 32
      %128 = vsyncadd [#allocation4], %s127
      %s129 = sshll.u32 [#allocation7], 4
      %s130 = int_to_ptr.vmem [resolvable:$true] %s129
      %135 = dma.vmem_to_hbm [thread:$0]  %s130, 32, %s2, [#allocation4], 32, 32, 2
    $region21: #{tpu_custom_call.1} parent=1 // pred_fallthru
      _
    // Predicated region
    $region22: #{tpu_custom_call.1} parent=1 // pred_check
      _
    $region23: #{tpu_custom_call.1} parent=1 // pred_check_branch
      %137 = sbr.rel (0) target = $region25
    $region24: #{tpu_custom_call.1} parent=1 // pred_region
      %138 = dma.done [#allocation4], 128
    $region25: #{tpu_custom_call.1} parent=1 // pred_fallthru
      _
    %139 = vsyncpa [#allocation3], 1
    %140 = vsyncpa [#allocation6], 1
    %141 = vsyncpa [#allocation4], 1

</llo_original>
